<compile_context>
chip_gen: v7x
topology: tpu7x:2x2x1
jax: 0.10.0
libtpu: 0.0.40
codegen_flags: <defaults>
</compile_context>

<pallas_src>
import jax
import jax.numpy as jnp
from jax.experimental import pallas as pl
from jax.experimental.pallas import tpu as pltpu


def _height_norm_kernel(pts_ref, sel_ref, out_ref):
    # pts_ref/out_ref: (TB, N*C) flattened batch rows.
    # sel_ref: (1, N*C), 1.0 on lanes whose channel == dim, 0.0 elsewhere.
    pts = pts_ref[...]
    sel = sel_ref[...]
    is_dim = sel > 0.5
    masked = jnp.where(is_dim, pts, jnp.array(jnp.inf, pts.dtype))
    mins = jnp.min(masked, axis=-1, keepdims=True)        # (TB, 1) per-row min
    # Only the `dim` lanes change: pts - 1*min there, pts - 0 elsewhere.
    out_ref[...] = pts - sel * mins


def _height_min_kernel(pts_ref, sel_ref, min_ref):
    # Per-batch-row min of channel `dim` (used by the append=True path).
    pts = pts_ref[...]
    is_dim = sel_ref[...] > 0.5
    masked = jnp.where(is_dim, pts, jnp.array(jnp.inf, pts.dtype))
    min_ref[...] = jnp.min(masked, axis=-1, keepdims=True)


def _row_blocking(B, row_bytes, target_block_bytes=4 << 20):
    """Pick TB whole batch rows per block (sublane dim) and the grid length."""
    rows_fit = max(1, target_block_bytes // max(row_bytes, 1))
    if B <= 8:
        tb = B  # block sublane dim == full batch dim: always a legal block
    else:
        # Multiple-of-8 row blocks near the target size; keep >=2 grid steps
        # so the v7x megacore can shard blocks across both TensorCores.
        tb = min(rows_fit, (B + 1) // 2)
        tb = max(8, (tb // 8) * 8)
        tb = min(tb, B)
    return tb, pl.cdiv(B, tb)


def pointcloud_height_normalization(points, dim, append=False):
    """Functional equivalent of PointcloudHeightNormalization.forward."""
    B, N, C = points.shape
    dtype = points.dtype
    d = dim % C
    NC = N * C

    flat = points.reshape(B, NC)  # free, contiguous, lane-dense layout

    # One-hot channel selector, pre-tiled to full lane width in the wrapper
    # and kept VMEM-resident across grid steps (constant index_map).
    sel = jnp.tile((jnp.arange(C) == d).astype(dtype), N).reshape(1, NC)

    itemsize = jnp.dtype(dtype).itemsize
    row_bytes = NC * itemsize
    TB, num_blocks = _row_blocking(B, row_bytes)
    block_bytes = TB * row_bytes

    # in + out blocks are double-buffered; sel is one small resident row.
    # TODO(synk): very large rows (N*C*itemsize >~ 10 MiB) need a two-pass
    # tiled variant (min kernel, then subtract kernel) to stay inside v7x's
    # 64 MiB VMEM; not implemented here.
    vmem_limit = int(min(max(4 * block_bytes + 4 * row_bytes + (2 << 20),
                             16 << 20),
                         48 << 20))

    compiler_params = pltpu.CompilerParams(
        dimension_semantics=("parallel",),
        vmem_limit_bytes=vmem_limit,
    )

    pts_spec = pl.BlockSpec((TB, NC), lambda i: (i, 0))
    sel_spec = pl.BlockSpec((1, NC), lambda i: (0, 0))

    if not append:
        out_flat = pl.pallas_call(
            _height_norm_kernel,
            out_shape=jax.ShapeDtypeStruct((B, NC), dtype),
            grid_spec=pltpu.PrefetchScalarGridSpec(
                num_scalar_prefetch=0,
                grid=(num_blocks,),
                in_specs=[pts_spec, sel_spec],
                out_specs=pl.BlockSpec((TB, NC), lambda i: (i, 0)),
            ),
            compiler_params=compiler_params,
            input_output_aliases={0: 0},  # in-place, like the torch module
        )(flat, sel)
        return out_flat.reshape(B, N, C)

    # append=True: per-batch min via the same lane-dense layout, then append
    # the heights as a new channel.
    mins = pl.pallas_call(
        _height_min_kernel,
        out_shape=jax.ShapeDtypeStruct((B, 1), dtype),
        grid_spec=pltpu.PrefetchScalarGridSpec(
            num_scalar_prefetch=0,
            grid=(num_blocks,),
            in_specs=[pts_spec, sel_spec],
            out_specs=pl.BlockSpec((TB, 1), lambda i: (i, 0)),
        ),
        compiler_params=compiler_params,
    )(flat, sel)
    heights = points[:, :, d] - mins  # (B, N)
    # TODO(synk): the channel-interleaving concat (and strided gather of
    # channel `dim`) is left to XLA; an in-kernel version would need a lane
    # re-interleave with no clean Pallas equivalent.
    return jnp.concatenate([points, heights[:, :, None]], axis=-1)


if __name__ == "__main__":
    key = jax.random.PRNGKey(0)
    B, N, C = 2, 256, 4   # xyz + one extra feature channel
    dim = 2               # normalize the z / height channel
    points = jax.random.normal(key, (B, N, C), dtype=jnp.float32)

    # Pure-JAX reference (computed before the kernel calls).
    min_h = jnp.min(points[:, :, dim], axis=-1)
    heights = points[:, :, dim] - min_h[:, None]
    ref_replace = points.at[:, :, dim].set(heights)
    ref_append = jnp.concatenate([points, heights[:, :, None]], axis=-1)

    out_replace = jax.block_until_ready(
        pointcloud_height_normalization(points, dim=dim, append=False))
    out_append = jax.block_until_ready(
        pointcloud_height_normalization(points, dim=dim, append=True))

    assert out_replace.shape == (B, N, C) and out_replace.dtype == points.dtype
    assert out_append.shape == (B, N, C + 1) and out_append.dtype == points.dtype
    assert jnp.allclose(out_replace, ref_replace, atol=1e-6, rtol=1e-6)
    assert jnp.allclose(out_append, ref_append, atol=1e-6, rtol=1e-6)
    print("KERNEL_OK")
</pallas_src>

<mosaic_0001>
module attributes {stable_mosaic.version = 11 : i64} {
  func.func @_height_norm_kernel(%arg0: i32, %arg1: memref<2x1024xf32, #tpu.memory_space<vmem>>, %arg2: memref<1x1024xf32, #tpu.memory_space<vmem>>, %arg3: memref<2x1024xf32, #tpu.memory_space<vmem>>) attributes {dimension_semantics = [#tpu.dimension_semantics<parallel>], iteration_bounds = array<i64: 1>, scalar_prefetch = 0 : i64, scratch_operands = 0 : i64, tpu.core_type = #tpu.core_type<tc>, window_params = [{transform_indices = @transform_0, window_bounds = array<i64: 2, 1024>}, {pipeline_mode = #tpu.pipeline_mode<synchronous>, transform_indices = @transform_1, window_bounds = array<i64: 1, 1024>}, {transform_indices = @transform_2, window_bounds = array<i64: 2, 1024>}]} {
    %c0 = arith.constant 0 : index
    %c0_0 = arith.constant 0 : index
    %0 = vector.load %arg1[%c0, %c0_0] : memref<2x1024xf32, #tpu.memory_space<vmem>>, vector<2x1024xf32>
    %c0_1 = arith.constant 0 : index
    %c0_2 = arith.constant 0 : index
    %1 = vector.load %arg2[%c0_1, %c0_2] : memref<1x1024xf32, #tpu.memory_space<vmem>>, vector<1x1024xf32>
    %cst = arith.constant 5.000000e-01 : f32
    %2 = vector.broadcast %cst : f32 to vector<1x1024xf32>
    %3 = arith.cmpf ogt, %1, %2 : vector<1x1024xf32>
    %cst_3 = arith.constant 0x7F800000 : f32
    %4 = vector.shape_cast %3 : vector<1x1024xi1> to vector<1x1024xi1>
    %5 = vector.broadcast %4 : vector<1x1024xi1> to vector<2x1024xi1>
    %6 = vector.broadcast %cst_3 : f32 to vector<2x1024xf32>
    %7 = arith.select %5, %0, %6 : vector<2x1024xi1>, vector<2x1024xf32>
    %cst_4 = arith.constant dense<0x7F800000> : vector<2xf32>
    %8 = vector.multi_reduction <minimumf>, %7, %cst_4 [1] : vector<2x1024xf32> to vector<2xf32>
    %9 = vector.shape_cast %8 : vector<2xf32> to vector<2x1xf32>
    %10 = vector.broadcast %1 : vector<1x1024xf32> to vector<2x1024xf32>
    %11 = vector.broadcast %9 : vector<2x1xf32> to vector<2x1024xf32>
    %12 = arith.mulf %10, %11 : vector<2x1024xf32>
    %13 = arith.subf %0, %12 : vector<2x1024xf32>
    %c0_5 = arith.constant 0 : index
    %c0_6 = arith.constant 0 : index
    %14 = vector.load %arg3[%c0_5, %c0_6] : memref<2x1024xf32, #tpu.memory_space<vmem>>, vector<2x1024xf32>
    tpu.vector_store %arg3[%c0_5, %c0_6], %13 {strides = array<i32>} : memref<2x1024xf32, #tpu.memory_space<vmem>>, vector<2x1024xf32>,
    return
  }
  func.func @transform_0(%arg0: i32) -> (i32, i32) {
    %c0_i32 = arith.constant 0 : i32
    %c0_i32_0 = arith.constant 0 : i32
    return %arg0, %c0_i32 : i32, i32
  }
  func.func @transform_1(%arg0: i32) -> (i32, i32) {
    %c0_i32 = arith.constant 0 : i32
    %c0_i32_0 = arith.constant 0 : i32
    %c0_i32_1 = arith.constant 0 : i32
    return %c0_i32, %c0_i32_0 : i32, i32
  }
  func.func @transform_2(%arg0: i32) -> (i32, i32) {
    %c0_i32 = arith.constant 0 : i32
    %c0_i32_0 = arith.constant 0 : i32
    return %arg0, %c0_i32 : i32, i32
  }
}

</mosaic_0001>

<llo_original>
// kernel: tpu_custom_call.1
$region0: #{tpu_custom_call.1}
  #allocation0 [shape = 'u32[]', space=smem, size = 0x4, offset = 0x4, fixed_abs, tag = 'smem constant byte address 0x4 - core index']
  #allocation1 [shape = 'u32[144,128]{1,0:T(1,128)}', space=vmem, size = 0x12000, scoped, tag = 'internal scratch']
  %s0 = inlined_call_operand.hbm [shape: f32[2,1024], index: 0, kind: input, shape index: {}, may-alias: {0,2}]
  %s1 = inlined_call_operand.vmem [shape: f32[1,1024], index: 1, kind: input, shape index: {}]
  %s2 = inlined_call_operand.hbm [shape: f32[2,1024], index: 2, kind: output, shape index: {}, may-alias: {0,2}]
  %s3 = sld [smem:[#allocation0]]
  $region22: #{tpu_custom_call.1} parent=0
    _
  %s5 = ssub.s32 1, %s3
  %s6 = scalar_select 0, %s5, %s3
  $region1: #{tpu_custom_call.1} parent=0
    #allocation2 [shape = 'u8[8192]{0}', space=vmem, size = 0x2000, scoped, tag = 'input window, operand 0, single buffered']
    #allocation3 [shape = 's32[1]{0}', space=sflag, size = 0x4, scoped, tag = 'scoped memory for tpu_custom_call.1']
    #allocation4 [shape = 's32[1]{0}', space=sflag, size = 0x4, scoped, tag = 'scoped memory for tpu_custom_call.1']
    #allocation5 [shape = 'u8[8192]{0}', space=vmem, size = 0x2000, scoped, tag = 'output window, operand 0, single buffered']
    %7 = vsyncpa [#allocation3], 0
    %8 = vsyncpa [#allocation4], 0
    // Predicated region
    $region2: #{tpu_custom_call.1} parent=1 // pred_check
      _
    $region3: #{tpu_custom_call.1} parent=1 // pred_check_branch
      %10 = sbr.rel (0) target = $region5
    $region4: #{tpu_custom_call.1} parent=1 // pred_region
      %s12 = ssub.s32 256, 256
      %13 = vsyncadd [#allocation3], %s12
      %s15 = sshll.u32 [#allocation2], 4
      %s16 = int_to_ptr.vmem [resolvable:$true] %s15
      %18 = dma.hbm_to_vmem [thread:$0]  %s0, 256, %s16, [#allocation3]
    $region5: #{tpu_custom_call.1} parent=1 // pred_fallthru
      _
    // Predicated region
    $region6: #{tpu_custom_call.1} parent=1 // pred_check
      _
    $region7: #{tpu_custom_call.1} parent=1 // pred_check_branch
      %20 = sbr.rel (0) target = $region9
    $region8: #{tpu_custom_call.1} parent=1 // pred_region
      _
    $region9: #{tpu_custom_call.1} parent=1 // pred_fallthru
      _
    // Predicated region
    $region10: #{tpu_custom_call.1} parent=1 // pred_check
      _
    $region11: #{tpu_custom_call.1} parent=1 // pred_check_branch
      %22 = sbr.rel (0) target = $region13
    $region12: #{tpu_custom_call.1} parent=1 // pred_region
      %23 = dma.done [#allocation3], 256
    $region13: #{tpu_custom_call.1} parent=1 // pred_fallthru
      _
    %v24 = vld [vmem:[#allocation2] sm:$0xff]
    %v25 = vld [vmem:[#allocation2 + $0x8] sm:$0xff]
    %v26 = vld [vmem:[%s1] sm:$0xff]
    %vm27 = vcmp.gt.f32.partialorder %v26, 0.5
    %v28 = vsel %vm27, 1, 0
    %v29 = vlaneseq
    %v30 = vshrl.u32 %v29, 7
    %v31 = vsub.s32 0, %v30
    %v32 = vrot.slane %v28, %v31
    %v33 = vlaneseq
    %v34 = vshrl.u32 %v33, 7
    %v35 = vsub.s32 1, %v34
    %v36 = vrot.slane %v28, %v35
    %v37 = vlaneseq
    %v38 = vshrl.u32 %v37, 7
    %v39 = vsub.s32 2, %v38
    %v40 = vrot.slane %v28, %v39
    %v41 = vlaneseq
    %v42 = vshrl.u32 %v41, 7
    %v43 = vsub.s32 3, %v42
    %v44 = vrot.slane %v28, %v43
    %v45 = vlaneseq
    %v46 = vshrl.u32 %v45, 7
    %v47 = vsub.s32 4, %v46
    %v48 = vrot.slane %v28, %v47
    %v49 = vlaneseq
    %v50 = vshrl.u32 %v49, 7
    %v51 = vsub.s32 5, %v50
    %v52 = vrot.slane %v28, %v51
    %v53 = vlaneseq
    %v54 = vshrl.u32 %v53, 7
    %v55 = vsub.s32 6, %v54
    %v56 = vrot.slane %v28, %v55
    %v57 = vlaneseq
    %v58 = vshrl.u32 %v57, 7
    %v59 = vsub.s32 7, %v58
    %v60 = vrot.slane %v28, %v59
    %vm61 = vcmp.eq.s32.totalorder %v32, 1
    %vm62 = vcmp.eq.s32.totalorder %v36, 1
    %vm63 = vcmp.eq.s32.totalorder %v40, 1
    %vm64 = vcmp.eq.s32.totalorder %v44, 1
    %vm65 = vcmp.eq.s32.totalorder %v48, 1
    %vm66 = vcmp.eq.s32.totalorder %v52, 1
    %vm67 = vcmp.eq.s32.totalorder %v56, 1
    %vm68 = vcmp.eq.s32.totalorder %v60, 1
    %v71 = vcombine.high %v24, %v24
    %v73 = vunpack.c.l.s4 1983009808
    %v74 = vunpack.c.0.s8 %v73
    %v75 = vlaneseq
    %v76 = vshrl.u32 %v75, 7
    %v77 = vsub.s32 %v74, %v76
    %v78 = vrot.slane %v24, %v77
    %v80 = vunpack.c.l.s4 1983009808
    %v81 = vunpack.c.0.s8 %v80
    %v82 = vlaneseq
    %v83 = vshrl.u32 %v82, 7
    %v84 = vsub.s32 %v81, %v83
    %v85 = vrot.slane %v71, %v84
    %v86 = vcombine.high %v78, %v78
    %v87 = vcombine.high %v85, %v85
    %v88 = vcombine.high %v25, %v25
    %v90 = vunpack.c.l.s4 1983009808
    %v91 = vunpack.c.0.s8 %v90
    %v92 = vlaneseq
    %v93 = vshrl.u32 %v92, 7
    %v94 = vsub.s32 %v91, %v93
    %v95 = vrot.slane %v25, %v94
    %v97 = vunpack.c.l.s4 1983009808
    %v98 = vunpack.c.0.s8 %v97
    %v99 = vlaneseq
    %v100 = vshrl.u32 %v99, 7
    %v101 = vsub.s32 %v98, %v100
    %v102 = vrot.slane %v88, %v101
    %v103 = vcombine.high %v95, %v95
    %v104 = vcombine.high %v102, %v102
    %v113 = vsel %vm61, %v78, inf
    %v114 = vsel %vm62, %v86, inf
    %v115 = vsel %vm63, %v85, inf
    %v116 = vsel %vm64, %v87, inf
    %v117 = vsel %vm65, %v95, inf
    %v118 = vsel %vm66, %v103, inf
    %v119 = vsel %vm67, %v102, inf
    %v120 = vsel %vm68, %v104, inf
    %vm121 = vcmask 1041408
    %v122 = vsel %vm121, %v113, inf
    %v123 = vsel %vm121, %v114, inf
    %v124 = vsel %vm121, %v115, inf
    %v125 = vsel %vm121, %v116, inf
    %v126 = vsel %vm121, %v117, inf
    %v127 = vmin.f32 %v122, %v126
    %v128 = vsel %vm121, %v118, inf
    %v129 = vmin.f32 %v123, %v128
    %v130 = vsel %vm121, %v119, inf
    %v131 = vmin.f32 %v124, %v130
    %v132 = vsel %vm121, %v120, inf
    %v133 = vmin.f32 %v125, %v132
    %v134 = vmin.f32 %v127, %v129
    %v135 = vmin.f32 %v131, %v133
    %v136 = vmin.f32 %v134, %v135
    %137 = vmin.xlane.f32.xlu0 %v136
    %v138 = vpop.xlane.xlu0 %137
    %v140 = vlaneseq
    %v141 = vshrl.u32 %v140, 7
    %v142 = vsub.s32 0, %v141
    %v143 = vrot.slane %v26, %v142
    %v144 = vlaneseq
    %v145 = vshrl.u32 %v144, 7
    %v146 = vsub.s32 1, %v145
    %v147 = vrot.slane %v26, %v146
    %v148 = vlaneseq
    %v149 = vshrl.u32 %v148, 7
    %v150 = vsub.s32 2, %v149
    %v151 = vrot.slane %v26, %v150
    %v152 = vlaneseq
    %v153 = vshrl.u32 %v152, 7
    %v154 = vsub.s32 3, %v153
    %v155 = vrot.slane %v26, %v154
    %v156 = vlaneseq
    %v157 = vshrl.u32 %v156, 7
    %v158 = vsub.s32 4, %v157
    %v159 = vrot.slane %v26, %v158
    %v160 = vlaneseq
    %v161 = vshrl.u32 %v160, 7
    %v162 = vsub.s32 5, %v161
    %v163 = vrot.slane %v26, %v162
    %v164 = vlaneseq
    %v165 = vshrl.u32 %v164, 7
    %v166 = vsub.s32 6, %v165
    %v167 = vrot.slane %v26, %v166
    %v168 = vlaneseq
    %v169 = vshrl.u32 %v168, 7
    %v170 = vsub.s32 7, %v169
    %v171 = vrot.slane %v26, %v170
    %v180 = vmul.f32 %v143, %v138
    %v181 = vmul.f32 %v147, %v138
    %v182 = vmul.f32 %v151, %v138
    %v183 = vmul.f32 %v155, %v138
    %v184 = vmul.f32 %v159, %v138
    %v185 = vmul.f32 %v163, %v138
    %v186 = vmul.f32 %v167, %v138
    %v187 = vmul.f32 %v171, %v138
    %v196 = vcombine.low %v180, %v181
    %v197 = vcombine.low %v182, %v183
    %v199 = vunpack.c.l.s4 1983009808
    %v200 = vunpack.c.0.s8 %v199
    %v201 = vlaneseq
    %v202 = vshrl.u32 %v201, 7
    %v203 = vsub.s32 %v200, %v202
    %v204 = vrot.slane %v196, %v203
    %v206 = vunpack.c.l.s4 1983009808
    %v207 = vunpack.c.0.s8 %v206
    %v208 = vlaneseq
    %v209 = vshrl.u32 %v208, 7
    %v210 = vsub.s32 %v207, %v209
    %v211 = vrot.slane %v197, %v210
    %v212 = vcombine.low %v204, %v211
    %v213 = vcombine.low %v184, %v185
    %v214 = vcombine.low %v186, %v187
    %v216 = vunpack.c.l.s4 1983009808
    %v217 = vunpack.c.0.s8 %v216
    %v218 = vlaneseq
    %v219 = vshrl.u32 %v218, 7
    %v220 = vsub.s32 %v217, %v219
    %v221 = vrot.slane %v213, %v220
    %v223 = vunpack.c.l.s4 1983009808
    %v224 = vunpack.c.0.s8 %v223
    %v225 = vlaneseq
    %v226 = vshrl.u32 %v225, 7
    %v227 = vsub.s32 %v224, %v226
    %v228 = vrot.slane %v214, %v227
    %v229 = vcombine.low %v221, %v228
    %v232 = vsub.f32 %v24, %v212
    %v233 = vsub.f32 %v25, %v229
    %234 = vst [vmem:[#allocation5] sm:$0xff] %v232
    %235 = vst [vmem:[#allocation5 + $0x8] sm:$0xff] %v233
    // Predicated region
    $region14: #{tpu_custom_call.1} parent=1 // pred_check
      _
    $region15: #{tpu_custom_call.1} parent=1 // pred_check_branch
      %237 = sbr.rel (0) target = $region17
    $region16: #{tpu_custom_call.1} parent=1 // pred_region
      %s239 = ssub.s32 256, 256
      %240 = vsyncadd [#allocation4], %s239
      %s242 = sshll.u32 [#allocation5], 4
      %s243 = int_to_ptr.vmem [resolvable:$true] %s242
      %245 = dma.vmem_to_hbm [thread:$0]  %s243, 256, %s2, [#allocation4]
    $region17: #{tpu_custom_call.1} parent=1 // pred_fallthru
      _
    // Predicated region
    $region18: #{tpu_custom_call.1} parent=1 // pred_check
      _
    $region19: #{tpu_custom_call.1} parent=1 // pred_check_branch
      %247 = sbr.rel (0) target = $region21
    $region20: #{tpu_custom_call.1} parent=1 // pred_region
      %248 = dma.done [#allocation4], 256
    $region21: #{tpu_custom_call.1} parent=1 // pred_fallthru
      _
    %249 = vsyncpa [#allocation3], 1
    %250 = vsyncpa [#allocation4], 1

</llo_original>
